<compile_context>
chip_gen: v7x
topology: tpu7x:2x2x1
jax: 0.10.0
libtpu: 0.0.40
codegen_flags: <defaults>
</compile_context>

<pallas_src>
import functools

import jax
import jax.numpy as jnp
from jax.experimental import pallas as pl
from jax.experimental.pallas import tpu as pltpu


def _round_up(n, m):
    return (n + m - 1) // m * m


def _pad_gate_blocks(m, h, hp, rows_pad):
    """m: (rows, 4*h) laid out as 4 gate blocks of width h (order [i,f,o,g]).

    Returns (rows_pad, 4*hp) with each gate block zero-padded to width hp and
    the rows zero-padded to rows_pad, so gate g lives at lanes [g*hp, g*hp+h).
    """
    rows = m.shape[0]
    blocks = []
    for g in range(4):
        blk = m[:, g * h:(g + 1) * h]
        blk = jnp.pad(blk, ((0, rows_pad - rows), (0, hp - h)))
        blocks.append(blk)
    return jnp.concatenate(blocks, axis=1)


def _vmem_limit_bytes(bp, kp, hp):
    f32, bf16 = 4, 2
    blk = (
        bp * kp * f32                 # x (constant block)
        + 2 * bp * hp * f32           # h0, c0 blocks
        + kp * 4 * hp * bf16          # w_ih^T block
        + hp * 4 * hp * bf16          # w_hh^T block
        + 8 * 4 * hp * f32            # fused bias block (sublane padded)
        + 2 * bp * hp * f32           # h_out, c_out blocks
    )
    total = 2 * blk                   # BlockSpec double-buffering
    total += bp * kp * f32            # layer_in VMEM scratch
    total += 8 * bp * 4 * hp * f32    # in-kernel temporaries headroom
    return int(min(max(total, 32 << 20), 64 << 20))


def _fused_lstm_kernel(x_ref, h0_ref, c0_ref, wih_ref, whh_ref, b_ref,
                       h_out_ref, c_out_ref, xin_ref, *, hidden_pad):
    """One LSTM layer per grid step; grid axis = layer (serial, 'arbitrary').

    Block shapes:
      x_ref   : (Bp, Kp)        f32, constant across the grid
      h0/c0   : (1, Bp, Hp)     f32, layer slice
      wih_ref : (1, Kp, 4*Hp)   bf16, gate order [i, f, o, g]
      whh_ref : (1, Hp, 4*Hp)   bf16
      b_ref   : (1, 1, 4*Hp)    f32 (b_ih + b_hh, reordered, padded)
      h/c out : (1, Bp, Hp)     f32
      xin_ref : (Bp, Kp)        f32 VMEM scratch carrying the layer input
    """
    hp = hidden_pad
    layer = pl.program_id(0)

    @pl.when(layer == 0)
    def _():
        xin_ref[...] = x_ref[...]          # seed the recurrence with x

    h_prev = h0_ref[0]                     # (Bp, Hp) f32
    c_prev = c0_ref[0]                     # (Bp, Hp) f32
    layer_in = xin_ref[...]                # (Bp, Kp) f32

    gates = (
        jnp.dot(layer_in.astype(jnp.bfloat16), wih_ref[0],
                preferred_element_type=jnp.float32)
        + jnp.dot(h_prev.astype(jnp.bfloat16), whh_ref[0],
                  preferred_element_type=jnp.float32)
        + b_ref[0]
    )                                      # (Bp, 4*Hp) f32, lane-dense

    # Gate order was rearranged to [i, f, o, g] at init: one sigmoid pass over
    # the first 3*Hp lanes, one tanh pass over the last Hp lanes.
    sig = jax.nn.sigmoid(gates[:, :3 * hp])
    g_g = jnp.tanh(gates[:, 3 * hp:])
    i_g = sig[:, 0 * hp:1 * hp]
    f_g = sig[:, 1 * hp:2 * hp]
    o_g = sig[:, 2 * hp:3 * hp]

    c_new = f_g * c_prev + i_g * g_g
    h_new = o_g * jnp.tanh(c_new)

    h_out_ref[0] = h_new
    c_out_ref[0] = c_new
    # Next layer's input stays in VMEM; never round-trips HBM.
    xin_ref[:, :hp] = h_new


def _fused_lstm_forward(wih_stack, whh_stack, b_stack, x, h0_bhl, c0_bhl,
                        *, hidden_size):
    """wih/whh/b stacks are the per-layer prepped weights from __init__."""
    B, fin = x.shape
    L, kp, four_hp = wih_stack.shape
    hp = whh_stack.shape[1]
    H = hidden_size
    bp = _round_up(B, 8)

    # Zero-pad to (8, 128)-aligned, lane-dense kernel shapes.
    x_pad = jnp.zeros((bp, kp), jnp.float32).at[:B, :fin].set(x)
    h0 = jnp.transpose(h0_bhl, (2, 0, 1))              # (L, B, H)
    c0 = jnp.transpose(c0_bhl, (2, 0, 1))
    h0_pad = jnp.zeros((L, bp, hp), jnp.float32).at[:, :B, :H].set(h0)
    c0_pad = jnp.zeros((L, bp, hp), jnp.float32).at[:, :B, :H].set(c0)

    kernel = functools.partial(_fused_lstm_kernel, hidden_pad=hp)

    grid_spec = pltpu.PrefetchScalarGridSpec(
        num_scalar_prefetch=0,
        grid=(L,),
        in_specs=[
            pl.BlockSpec((bp, kp), lambda l: (0, 0)),          # x (constant)
            pl.BlockSpec((1, bp, hp), lambda l: (l, 0, 0)),    # h0 layer slice
            pl.BlockSpec((1, bp, hp), lambda l: (l, 0, 0)),    # c0 layer slice
            pl.BlockSpec((1, kp, four_hp), lambda l: (l, 0, 0)),   # w_ih^T
            pl.BlockSpec((1, hp, four_hp), lambda l: (l, 0, 0)),   # w_hh^T
            pl.BlockSpec((1, 1, four_hp), lambda l: (l, 0, 0)),    # bias
        ],
        out_specs=(
            pl.BlockSpec((1, bp, hp), lambda l: (l, 0, 0)),
            pl.BlockSpec((1, bp, hp), lambda l: (l, 0, 0)),
        ),
        scratch_shapes=[pltpu.VMEM((bp, kp), jnp.float32)],
    )

    h_out, c_out = pl.pallas_call(
        kernel,
        out_shape=(
            jax.ShapeDtypeStruct((L, bp, hp), jnp.float32),
            jax.ShapeDtypeStruct((L, bp, hp), jnp.float32),
        ),
        grid_spec=grid_spec,
        compiler_params=pltpu.CompilerParams(
            dimension_semantics=("arbitrary",),          # serial layer chain
            vmem_limit_bytes=_vmem_limit_bytes(bp, kp, hp),
        ),
    )(x_pad, h0_pad, c0_pad, wih_stack, whh_stack, b_stack)

    # Crop padding and restore the torch (batch, hidden, num_layers) layout.
    next_h = jnp.transpose(h_out[:, :B, :H], (1, 2, 0))
    next_c = jnp.transpose(c_out[:, :B, :H], (1, 2, 0))
    return next_h, next_c


class MultiLayerLSTMCellPallas:
    """JAX/Pallas port of model/MultiLayerLSTMCell.py (forward only)."""

    def __init__(self, input_size, hidden_size, num_layers, key):
        self.input_size = input_size
        self.hidden_size = hidden_size
        self.num_layers = num_layers

        H = hidden_size
        hp = _round_up(H, 128)                       # lane-dense hidden
        kp = max(_round_up(input_size, 128), hp)     # layer-input lane width
        self._hp, self._kp = hp, kp

        # Gate reorder: torch LSTMCell order is [i, f, g, o]; kernel uses
        # [i, f, o, g] so sigmoid/tanh each cover one contiguous lane range.
        perm = jnp.concatenate([
            jnp.arange(0 * H, 1 * H),   # i
            jnp.arange(1 * H, 2 * H),   # f
            jnp.arange(3 * H, 4 * H),   # o
            jnp.arange(2 * H, 3 * H),   # g
        ])

        self.raw_params = []     # torch-shaped f32 params (reference check)
        wih_l, whh_l, b_l = [], [], []
        k = 1.0 / float(hidden_size) ** 0.5
        for layer in range(num_layers):
            in_sz = input_size if layer == 0 else hidden_size
            key, k1, k2, k3, k4 = jax.random.split(key, 5)
            # Same shapes / init range as torch.nn.LSTMCell defaults.
            w_ih = jax.random.uniform(k1, (4 * H, in_sz), jnp.float32, -k, k)
            w_hh = jax.random.uniform(k2, (4 * H, H), jnp.float32, -k, k)
            b_ih = jax.random.uniform(k3, (4 * H,), jnp.float32, -k, k)
            b_hh = jax.random.uniform(k4, (4 * H,), jnp.float32, -k, k)
            self.raw_params.append((w_ih, w_hh, b_ih, b_hh))

            # Hoisted weight prep (once, never in the hot path): transpose,
            # gate reorder, gate-block zero padding, bias fusion, bf16 cast.
            wih_t = w_ih.T[:, perm]                      # (in_sz, 4H)
            whh_t = w_hh.T[:, perm]                      # (H,     4H)
            bias = (b_ih + b_hh)[perm][None, :]          # (1,     4H)
            wih_l.append(_pad_gate_blocks(wih_t, H, hp, kp).astype(jnp.bfloat16))
            whh_l.append(_pad_gate_blocks(whh_t, H, hp, hp).astype(jnp.bfloat16))
            b_l.append(_pad_gate_blocks(bias, H, hp, 1).astype(jnp.float32))

        self.wih_stack = jnp.stack(wih_l)    # (L, Kp, 4*Hp) bf16
        self.whh_stack = jnp.stack(whh_l)    # (L, Hp, 4*Hp) bf16
        self.b_stack = jnp.stack(b_l)        # (L, 1,  4*Hp) f32

        self._forward = jax.jit(
            functools.partial(_fused_lstm_forward, hidden_size=hidden_size))

    def __call__(self, x, prev):
        """x: (B, input_size); prev = (h0, c0), each (B, hidden, num_layers)."""
        h0, c0 = prev
        return self._forward(self.wih_stack, self.whh_stack, self.b_stack,
                             x, h0, c0)


def _reference_forward(model, x, prev, *, bf16_weights=False):
    """Pure-JAX reference of the same forward (optionally bf16-matched)."""
    h0, c0 = prev
    H = model.hidden_size
    hs, cs = [], []
    layer_input = x
    for i in range(model.num_layers):
        w_ih, w_hh, b_ih, b_hh = model.raw_params[i]
        if bf16_weights:
            gates = (
                jnp.dot(layer_input.astype(jnp.bfloat16),
                        w_ih.T.astype(jnp.bfloat16),
                        preferred_element_type=jnp.float32)
                + jnp.dot(h0[:, :, i].astype(jnp.bfloat16),
                          w_hh.T.astype(jnp.bfloat16),
                          preferred_element_type=jnp.float32)
                + (b_ih + b_hh))
        else:
            gates = layer_input @ w_ih.T + h0[:, :, i] @ w_hh.T + b_ih + b_hh
        ig = jax.nn.sigmoid(gates[:, 0 * H:1 * H])
        fg = jax.nn.sigmoid(gates[:, 1 * H:2 * H])
        gg = jnp.tanh(gates[:, 2 * H:3 * H])
        og = jax.nn.sigmoid(gates[:, 3 * H:4 * H])
        c_new = fg * c0[:, :, i] + ig * gg
        h_new = og * jnp.tanh(c_new)
        hs.append(h_new)
        cs.append(c_new)
        layer_input = h_new
    return jnp.stack(hs).transpose(1, 2, 0), jnp.stack(cs).transpose(1, 2, 0)


if __name__ == "__main__":
    batch = 2
    input_size = 16
    hidden_size = 32
    num_layers = 3

    key = jax.random.PRNGKey(0)
    key, kx, kh, kc, kp = jax.random.split(key, 5)

    x = jax.random.normal(kx, (batch, input_size), jnp.float32)
    h0 = jax.random.normal(kh, (batch, hidden_size, num_layers), jnp.float32)
    c0 = jax.random.normal(kc, (batch, hidden_size, num_layers), jnp.float32)

    model = MultiLayerLSTMCellPallas(input_size, hidden_size, num_layers, kp)

    next_h, next_c = model(x, (h0, c0))
    jax.block_until_ready((next_h, next_c))

    assert next_h.shape == (batch, hidden_size, num_layers)
    assert next_c.shape == (batch, hidden_size, num_layers)

    # Primary check: bf16-weight-matched reference (tight tolerance).
    ref_h_bf16, ref_c_bf16 = _reference_forward(model, x, (h0, c0),
                                                bf16_weights=True)
    assert jnp.allclose(next_h, ref_h_bf16, atol=2e-3, rtol=2e-3)
    assert jnp.allclose(next_c, ref_c_bf16, atol=2e-3, rtol=2e-3)

    # Sanity check vs. the full-f32 torch-equivalent reference (loose, since
    # the kernel intentionally streams bf16 weights).
    ref_h, ref_c = _reference_forward(model, x, (h0, c0))
    assert jnp.allclose(next_h, ref_h, atol=1e-1, rtol=1e-1)
    assert jnp.allclose(next_c, ref_c, atol=1e-1, rtol=1e-1)

    print("KERNEL_OK")
</pallas_src>

<mosaic_0001>
module attributes {stable_mosaic.version = 11 : i64} {
  func.func @_fused_lstm_kernel(%arg0: i32, %arg1: memref<8x128xf32, #tpu.memory_space<vmem>>, %arg2: memref<1x8x128xf32, #tpu.memory_space<vmem>>, %arg3: memref<1x8x128xf32, #tpu.memory_space<vmem>>, %arg4: memref<1x128x512xbf16, #tpu.memory_space<vmem>>, %arg5: memref<1x128x512xbf16, #tpu.memory_space<vmem>>, %arg6: memref<1x1x512xf32, #tpu.memory_space<vmem>>, %arg7: memref<1x8x128xf32, #tpu.memory_space<vmem>>, %arg8: memref<1x8x128xf32, #tpu.memory_space<vmem>>, %arg9: memref<8x128xf32, #tpu.memory_space<vmem>>) attributes {dimension_semantics = [#tpu.dimension_semantics<arbitrary>], iteration_bounds = array<i64: 3>, scalar_prefetch = 0 : i64, scratch_operands = 1 : i64, tpu.core_type = #tpu.core_type<tc>, window_params = [{pipeline_mode = #tpu.pipeline_mode<synchronous>, transform_indices = @transform_0, window_bounds = array<i64: 8, 128>}, {transform_indices = @transform_1, window_bounds = array<i64: 1, 8, 128>}, {transform_indices = @transform_2, window_bounds = array<i64: 1, 8, 128>}, {transform_indices = @transform_3, window_bounds = array<i64: 1, 128, 512>}, {transform_indices = @transform_4, window_bounds = array<i64: 1, 128, 512>}, {transform_indices = @transform_5, window_bounds = array<i64: 1, 1, 512>}, {transform_indices = @transform_6, window_bounds = array<i64: 1, 8, 128>}, {transform_indices = @transform_7, window_bounds = array<i64: 1, 8, 128>}]} {
    %c0_i32 = arith.constant 0 : i32
    %0 = arith.cmpi eq, %arg0, %c0_i32 : i32
    %1 = arith.extui %0 : i1 to i32
    %c0_i32_0 = arith.constant 0 : i32
    %2 = arith.cmpi ne, %1, %c0_i32_0 : i32
    scf.if %2 {
      %c0_27 = arith.constant 0 : index
      %c0_28 = arith.constant 0 : index
      %44 = vector.load %arg1[%c0_27, %c0_28] : memref<8x128xf32, #tpu.memory_space<vmem>>, vector<8x128xf32>
      %c0_29 = arith.constant 0 : index
      %c0_30 = arith.constant 0 : index
      %45 = vector.load %arg9[%c0_29, %c0_30] : memref<8x128xf32, #tpu.memory_space<vmem>>, vector<8x128xf32>
      tpu.vector_store %arg9[%c0_29, %c0_30], %44 {strides = array<i32>} : memref<8x128xf32, #tpu.memory_space<vmem>>, vector<8x128xf32>,
    } else {
    }
    %c0 = arith.constant 0 : index
    %c0_1 = arith.constant 0 : index
    %c0_2 = arith.constant 0 : index
    %3 = vector.load %arg2[%c0, %c0_1, %c0_2] : memref<1x8x128xf32, #tpu.memory_space<vmem>>, vector<1x8x128xf32>
    %4 = vector.shape_cast %3 : vector<1x8x128xf32> to vector<8x128xf32>
    %c0_3 = arith.constant 0 : index
    %c0_4 = arith.constant 0 : index
    %c0_5 = arith.constant 0 : index
    %5 = vector.load %arg3[%c0_3, %c0_4, %c0_5] : memref<1x8x128xf32, #tpu.memory_space<vmem>>, vector<1x8x128xf32>
    %6 = vector.shape_cast %5 : vector<1x8x128xf32> to vector<8x128xf32>
    %c0_6 = arith.constant 0 : index
    %c0_7 = arith.constant 0 : index
    %7 = vector.load %arg9[%c0_6, %c0_7] : memref<8x128xf32, #tpu.memory_space<vmem>>, vector<8x128xf32>
    %8 = arith.truncf %7 : vector<8x128xf32> to vector<8x128xbf16>
    %c0_8 = arith.constant 0 : index
    %c0_9 = arith.constant 0 : index
    %c0_10 = arith.constant 0 : index
    %9 = vector.load %arg4[%c0_8, %c0_9, %c0_10] : memref<1x128x512xbf16, #tpu.memory_space<vmem>>, vector<1x128x512xbf16>
    %10 = vector.shape_cast %9 : vector<1x128x512xbf16> to vector<128x512xbf16>
    %cst = arith.constant dense<0.000000e+00> : vector<8x512xf32>
    %11 = tpu.matmul %8, %10, %cst {dimension_numbers = #tpu.dot_dimension_numbers<[1], [0], [0], [1], [0, 0, 1, 1], [], []>} : vector<8x128xbf16>, vector<128x512xbf16>, vector<8x512xf32> -> vector<8x512xf32>
    %12 = arith.truncf %4 : vector<8x128xf32> to vector<8x128xbf16>
    %c0_11 = arith.constant 0 : index
    %c0_12 = arith.constant 0 : index
    %c0_13 = arith.constant 0 : index
    %13 = vector.load %arg5[%c0_11, %c0_12, %c0_13] : memref<1x128x512xbf16, #tpu.memory_space<vmem>>, vector<1x128x512xbf16>
    %14 = vector.shape_cast %13 : vector<1x128x512xbf16> to vector<128x512xbf16>
    %cst_14 = arith.constant dense<0.000000e+00> : vector<8x512xf32>
    %15 = tpu.matmul %12, %14, %cst_14 {dimension_numbers = #tpu.dot_dimension_numbers<[1], [0], [0], [1], [0, 0, 1, 1], [], []>} : vector<8x128xbf16>, vector<128x512xbf16>, vector<8x512xf32> -> vector<8x512xf32>
    %16 = arith.addf %11, %15 : vector<8x512xf32>
    %c0_15 = arith.constant 0 : index
    %c0_16 = arith.constant 0 : index
    %c0_17 = arith.constant 0 : index
    %17 = vector.load %arg6[%c0_15, %c0_16, %c0_17] : memref<1x1x512xf32, #tpu.memory_space<vmem>>, vector<1x1x512xf32>
    %18 = vector.shape_cast %17 : vector<1x1x512xf32> to vector<1x512xf32>
    %19 = vector.broadcast %18 : vector<1x512xf32> to vector<8x512xf32>
    %20 = arith.addf %16, %19 : vector<8x512xf32>
    %21 = vector.extract_strided_slice %20 {offsets = [0, 0], sizes = [8, 384], strides = [1, 1]} : vector<8x512xf32> to vector<8x384xf32>
    %22 = arith.negf %21 : vector<8x384xf32>
    %23 = math.exp %22 : vector<8x384xf32>
    %cst_18 = arith.constant 1.000000e+00 : f32
    %24 = vector.broadcast %cst_18 : f32 to vector<8x384xf32>
    %25 = arith.addf %24, %23 : vector<8x384xf32>
    %26 = arith.divf %24, %25 : vector<8x384xf32>
    %27 = vector.extract_strided_slice %20 {offsets = [0, 384], sizes = [8, 128], strides = [1, 1]} : vector<8x512xf32> to vector<8x128xf32>
    %28 = math.tanh %27 : vector<8x128xf32>
    %29 = vector.extract_strided_slice %26 {offsets = [0, 0], sizes = [8, 128], strides = [1, 1]} : vector<8x384xf32> to vector<8x128xf32>
    %30 = vector.extract_strided_slice %26 {offsets = [0, 128], sizes = [8, 128], strides = [1, 1]} : vector<8x384xf32> to vector<8x128xf32>
    %31 = vector.extract_strided_slice %26 {offsets = [0, 256], sizes = [8, 128], strides = [1, 1]} : vector<8x384xf32> to vector<8x128xf32>
    %32 = arith.mulf %30, %6 : vector<8x128xf32>
    %33 = arith.mulf %29, %28 : vector<8x128xf32>
    %34 = arith.addf %32, %33 : vector<8x128xf32>
    %35 = math.tanh %34 : vector<8x128xf32>
    %36 = arith.mulf %31, %35 : vector<8x128xf32>
    %c0_19 = arith.constant 0 : index
    %c0_20 = arith.constant 0 : index
    %c0_21 = arith.constant 0 : index
    %37 = vector.load %arg7[%c0_19, %c0_20, %c0_21] : memref<1x8x128xf32, #tpu.memory_space<vmem>>, vector<1x8x128xf32>
    %38 = vector.shape_cast %37 : vector<1x8x128xf32> to vector<8x128xf32>
    %39 = vector.shape_cast %36 : vector<8x128xf32> to vector<1x8x128xf32>
    tpu.vector_store %arg7[%c0_19, %c0_20, %c0_21], %39 {strides = array<i32>} : memref<1x8x128xf32, #tpu.memory_space<vmem>>, vector<1x8x128xf32>,
    %c0_22 = arith.constant 0 : index
    %c0_23 = arith.constant 0 : index
    %c0_24 = arith.constant 0 : index
    %40 = vector.load %arg8[%c0_22, %c0_23, %c0_24] : memref<1x8x128xf32, #tpu.memory_space<vmem>>, vector<1x8x128xf32>
    %41 = vector.shape_cast %40 : vector<1x8x128xf32> to vector<8x128xf32>
    %42 = vector.shape_cast %34 : vector<8x128xf32> to vector<1x8x128xf32>
    tpu.vector_store %arg8[%c0_22, %c0_23, %c0_24], %42 {strides = array<i32>} : memref<1x8x128xf32, #tpu.memory_space<vmem>>, vector<1x8x128xf32>,
    %c0_25 = arith.constant 0 : index
    %c0_26 = arith.constant 0 : index
    %43 = vector.load %arg9[%c0_25, %c0_26] : memref<8x128xf32, #tpu.memory_space<vmem>>, vector<8x128xf32>
    tpu.vector_store %arg9[%c0_25, %c0_26], %36 {strides = array<i32>} : memref<8x128xf32, #tpu.memory_space<vmem>>, vector<8x128xf32>,
    return
  }
  func.func @transform_0(%arg0: i32) -> (i32, i32) {
    %c0_i32 = arith.constant 0 : i32
    %c0_i32_0 = arith.constant 0 : i32
    %c0_i32_1 = arith.constant 0 : i32
    return %c0_i32, %c0_i32_0 : i32, i32
  }
  func.func @transform_1(%arg0: i32) -> (i32, i32, i32) {
    %c0_i32 = arith.constant 0 : i32
    %c0_i32_0 = arith.constant 0 : i32
    %c0_i32_1 = arith.constant 0 : i32
    return %arg0, %c0_i32, %c0_i32_0 : i32, i32, i32
  }
  func.func @transform_2(%arg0: i32) -> (i32, i32, i32) {
    %c0_i32 = arith.constant 0 : i32
    %c0_i32_0 = arith.constant 0 : i32
    %c0_i32_1 = arith.constant 0 : i32
    return %arg0, %c0_i32, %c0_i32_0 : i32, i32, i32
  }
  func.func @transform_3(%arg0: i32) -> (i32, i32, i32) {
    %c0_i32 = arith.constant 0 : i32
    %c0_i32_0 = arith.constant 0 : i32
    %c0_i32_1 = arith.constant 0 : i32
    return %arg0, %c0_i32, %c0_i32_0 : i32, i32, i32
  }
  func.func @transform_4(%arg0: i32) -> (i32, i32, i32) {
    %c0_i32 = arith.constant 0 : i32
    %c0_i32_0 = arith.constant 0 : i32
    %c0_i32_1 = arith.constant 0 : i32
    return %arg0, %c0_i32, %c0_i32_0 : i32, i32, i32
  }
  func.func @transform_5(%arg0: i32) -> (i32, i32, i32) {
    %c0_i32 = arith.constant 0 : i32
    %c0_i32_0 = arith.constant 0 : i32
    %c0_i32_1 = arith.constant 0 : i32
    return %arg0, %c0_i32, %c0_i32_0 : i32, i32, i32
  }
  func.func @transform_6(%arg0: i32) -> (i32, i32, i32) {
    %c0_i32 = arith.constant 0 : i32
    %c0_i32_0 = arith.constant 0 : i32
    %c0_i32_1 = arith.constant 0 : i32
    return %arg0, %c0_i32, %c0_i32_0 : i32, i32, i32
  }
  func.func @transform_7(%arg0: i32) -> (i32, i32, i32) {
    %c0_i32 = arith.constant 0 : i32
    %c0_i32_0 = arith.constant 0 : i32
    %c0_i32_1 = arith.constant 0 : i32
    return %arg0, %c0_i32, %c0_i32_0 : i32, i32, i32
  }
}

</mosaic_0001>

<llo_original>
// kernel: _fused_lstm_forward.1
$region0: #{_fused_lstm_forward.1}
  #allocation0 [shape = 'u32[]', space=smem, size = 0x4, offset = 0x4, fixed_abs, tag = 'smem constant byte address 0x4 - core index']
  #allocation1 [shape = 'u32[144,128]{1,0:T(1,128)}', space=vmem, size = 0x12000, scoped, tag = 'internal scratch']
  #allocation2 [shape = 'f32[8,128]{1,0:T(8,128)}', space=vmem, size = 0x1000, scoped, tag = 'scratch operand']
  %s0 = inlined_call_operand.vmem [shape: f32[8,128], index: 0, kind: input, shape index: {}]
  %s1 = inlined_call_operand.vmem [shape: f32[3,8,128], index: 1, kind: input, shape index: {}]
  %s2 = inlined_call_operand.vmem [shape: f32[3,8,128], index: 2, kind: input, shape index: {}]
  %s3 = inlined_call_operand.hbm [shape: bf16[3,128,512], index: 3, kind: input, shape index: {}]
  %s4 = inlined_call_operand.hbm [shape: bf16[3,128,512], index: 4, kind: input, shape index: {}]
  %s5 = inlined_call_operand.vmem [shape: f32[3,1,512], index: 5, kind: input, shape index: {}]
  %s6 = inlined_call_operand.vmem [shape: f32[3,8,128], index: 6, kind: output, shape index: {0}]
  %s7 = inlined_call_operand.vmem [shape: f32[3,8,128], index: 7, kind: output, shape index: {1}]
  %8 = xla_tuple %s6, %s7
  %s9 = sld [smem:[#allocation0]]
  $region77: #{_fused_lstm_forward.1} parent=0
    _
  %s11 = ssub.s32 1, %s9
  %s12 = scalar_select 0, %s11, %s9
  $region1: #{_fused_lstm_forward.1} parent=0
    #allocation3 [shape = 'u8[262144]{0}', space=vmem, size = 0x40000, scoped, tag = 'input window, operand 3']
    #allocation4 [shape = 's32[2]{0}', space=sflag, size = 0x8, scoped, tag = 'scoped memory for _fused_lstm_forward.1']
    #allocation5 [shape = 'u8[262144]{0}', space=vmem, size = 0x40000, scoped, tag = 'input window, operand 4']
    #allocation6 [shape = 's32[2]{0}', space=sflag, size = 0x8, scoped, tag = 'scoped memory for _fused_lstm_forward.1']
    %13 = vsyncpa [#allocation4], 0
    %s14 = scalar_lea.sflag [#allocation4], 1
    %15 = vsyncpa %s14, 0
    %16 = vsyncpa [#allocation6], 0
    %s17 = scalar_lea.sflag [#allocation6], 1
    %18 = vsyncpa %s17, 0
    loop: start=0, step=1, limit=5
    $region2: #{_fused_lstm_forward.1} parent=1 // loop_pre_header
      _
    $region3: #{_fused_lstm_forward.1} parent=1 // loop_header
      %s20 = sphi 0, %s24
      %p21 = scmp.ge.s32.totalorder %s20, 5
      %s28 = sphi 0, %s28
      %s30 = sphi 0, %s28
      %s31 = sphi 0, %s30
      %s45 = sphi 0, %s31
      %s51 = sphi 0, %s53
      %s54 = sphi 0, %s51
      %s55 = sphi 0, %s54
      %s71 = sphi 0, %s55
      %s77 = sphi 0, %s79
      %s80 = sphi 0, %s77
      %s81 = sphi 0, %s80
      %s97 = sphi 0, %s81
      %s103 = sphi 0, %s105
      %s106 = sphi 0, %s103
      %s107 = sphi 0, %s106
      %s123 = sphi 0, %s107
      %s129 = sphi 0, %s131
      %s132 = sphi 0, %s129
      %s133 = sphi 0, %s132
      %s149 = sphi 0, %s133
      %s155 = sphi 0, %s157
      %s158 = sphi 0, %s155
      %s159 = sphi 0, %s158
      %s175 = sphi 0, %s159
      %s181 = sphi 0, %s183
      %s184 = sphi 0, %s181
      %s185 = sphi 0, %s184
      %s201 = sphi 0, %s185
      %s207 = sphi 0, %s209
      %s210 = sphi 0, %s207
      %s211 = sphi 0, %s210
      %s227 = sphi 0, %s211
    $region4: #{_fused_lstm_forward.1} parent=1 // loop_header_branch
      %23 = sbr.rel (%p21) target = $region8
    $region5: #{_fused_lstm_forward.1} parent=1 // loop_body
      %s25 = ssub.s32 %s20, 1
      %s26 = ssub.s32 %s20, 2
      %s27 = sadd.s32 %s20, 1
      %s29 = sadd.s32 %s28, 1
      %p32 = scmp.eq.s32.totalorder %s20, 2
      %p33 = scmp.ne.s32.totalorder %s28, %s30
      %p34 = scmp.eq.s32.totalorder %s20, 0
      %p35 = por %p33, %p34
      %p36 = scmp.ne.s32.totalorder %s28, %s30
      %p37 = scmp.eq.s32.totalorder %s25, 2
      %p38 = por %p36, %p37
      %p39 = scmp.ne.s32.totalorder %s30, %s31
      %p40 = scmp.eq.s32.totalorder %s25, 0
      %p41 = por %p39, %p40
      %p42 = scmp.ne.s32.totalorder %s30, %s31
      %p43 = scmp.eq.s32.totalorder %s26, 2
      %p44 = por %p42, %p43
      %p46 = scmp.ne.s32.totalorder %s31, %s45
      %p47 = scmp.eq.s32.totalorder %s26, 0
      %p48 = por %p46, %p47
      %s49 = ssub.s32 %s20, %s27
      %p50 = scmp.eq.s32.totalorder %s49, 0
      %s52 = sadd.s32 %s51, 1
      %s53 = scalar_select %p50, %s51, %s52
      %p56 = pneg %p50
      %p57 = scmp.eq.s32.totalorder %s20, 2
      %p58 = por %p56, %p57
      %p59 = scmp.ne.s32.totalorder %s51, %s54
      %p60 = scmp.eq.s32.totalorder %s20, 0
      %p61 = por %p59, %p60
      %p62 = scmp.ne.s32.totalorder %s51, %s54
      %p63 = scmp.eq.s32.totalorder %s25, 2
      %p64 = por %p62, %p63
      %p65 = scmp.ne.s32.totalorder %s54, %s55
      %p66 = scmp.eq.s32.totalorder %s25, 0
      %p67 = por %p65, %p66
      %p68 = scmp.ne.s32.totalorder %s54, %s55
      %p69 = scmp.eq.s32.totalorder %s26, 2
      %p70 = por %p68, %p69
      %p72 = scmp.ne.s32.totalorder %s55, %s71
      %p73 = scmp.eq.s32.totalorder %s26, 0
      %p74 = por %p72, %p73
      %s75 = ssub.s32 %s20, %s27
      %p76 = scmp.eq.s32.totalorder %s75, 0
      %s78 = sadd.s32 %s77, 1
      %s79 = scalar_select %p76, %s77, %s78
      %p82 = pneg %p76
      %p83 = scmp.eq.s32.totalorder %s20, 2
      %p84 = por %p82, %p83
      %p85 = scmp.ne.s32.totalorder %s77, %s80
      %p86 = scmp.eq.s32.totalorder %s20, 0
      %p87 = por %p85, %p86
      %p88 = scmp.ne.s32.totalorder %s77, %s80
      %p89 = scmp.eq.s32.totalorder %s25, 2
      %p90 = por %p88, %p89
      %p91 = scmp.ne.s32.totalorder %s80, %s81
      %p92 = scmp.eq.s32.totalorder %s25, 0
      %p93 = por %p91, %p92
      %p94 = scmp.ne.s32.totalorder %s80, %s81
      %p95 = scmp.eq.s32.totalorder %s26, 2
      %p96 = por %p94, %p95
      %p98 = scmp.ne.s32.totalorder %s81, %s97
      %p99 = scmp.eq.s32.totalorder %s26, 0
      %p100 = por %p98, %p99
      %s101 = ssub.s32 %s20, %s27
      %p102 = scmp.eq.s32.totalorder %s101, 0
      %s104 = sadd.s32 %s103, 1
      %s105 = scalar_select %p102, %s103, %s104
      %p108 = pneg %p102
      %p109 = scmp.eq.s32.totalorder %s20, 2
      %p110 = por %p108, %p109
      %p111 = scmp.ne.s32.totalorder %s103, %s106
      %p112 = scmp.eq.s32.totalorder %s20, 0
      %p113 = por %p111, %p112
      %p114 = scmp.ne.s32.totalorder %s103, %s106
      %p115 = scmp.eq.s32.totalorder %s25, 2
      %p116 = por %p114, %p115
      %p117 = scmp.ne.s32.totalorder %s106, %s107
      %p118 = scmp.eq.s32.totalorder %s25, 0
      %p119 = por %p117, %p118
      %p120 = scmp.ne.s32.totalorder %s106, %s107
      %p121 = scmp.eq.s32.totalorder %s26, 2
      %p122 = por %p120, %p121
      %p124 = scmp.ne.s32.totalorder %s107, %s123
      %p125 = scmp.eq.s32.totalorder %s26, 0
      %p126 = por %p124, %p125
      %s127 = ssub.s32 %s20, %s27
      %p128 = scmp.eq.s32.totalorder %s127, 0
      %s130 = sadd.s32 %s129, 1
      %s131 = scalar_select %p128, %s129, %s130
      %p134 = pneg %p128
      %p135 = scmp.eq.s32.totalorder %s20, 2
      %p136 = por %p134, %p135
      %p137 = scmp.ne.s32.totalorder %s129, %s132
      %p138 = scmp.eq.s32.totalorder %s20, 0
      %p139 = por %p137, %p138
      %p140 = scmp.ne.s32.totalorder %s129, %s132
      %p141 = scmp.eq.s32.totalorder %s25, 2
      %p142 = por %p140, %p141
      %p143 = scmp.ne.s32.totalorder %s132, %s133
      %p144 = scmp.eq.s32.totalorder %s25, 0
      %p145 = por %p143, %p144
      %p146 = scmp.ne.s32.totalorder %s132, %s133
      %p147 = scmp.eq.s32.totalorder %s26, 2
      %p148 = por %p146, %p147
      %p150 = scmp.ne.s32.totalorder %s133, %s149
      %p151 = scmp.eq.s32.totalorder %s26, 0
      %p152 = por %p150, %p151
      %s153 = ssub.s32 %s20, %s27
      %p154 = scmp.eq.s32.totalorder %s153, 0
      %s156 = sadd.s32 %s155, 1
      %s157 = scalar_select %p154, %s155, %s156
      %p160 = pneg %p154
      %p161 = scmp.eq.s32.totalorder %s20, 2
      %p162 = por %p160, %p161
      %p163 = scmp.ne.s32.totalorder %s155, %s158
      %p164 = scmp.eq.s32.totalorder %s20, 0
      %p165 = por %p163, %p164
      %p166 = scmp.ne.s32.totalorder %s155, %s158
      %p167 = scmp.eq.s32.totalorder %s25, 2
      %p168 = por %p166, %p167
      %p169 = scmp.ne.s32.totalorder %s158, %s159
      %p170 = scmp.eq.s32.totalorder %s25, 0
      %p171 = por %p169, %p170
      %p172 = scmp.ne.s32.totalorder %s158, %s159
      %p173 = scmp.eq.s32.totalorder %s26, 2
      %p174 = por %p172, %p173
      %p176 = scmp.ne.s32.totalorder %s159, %s175
      %p177 = scmp.eq.s32.totalorder %s26, 0
      %p178 = por %p176, %p177
      %s179 = ssub.s32 %s20, %s27
      %p180 = scmp.eq.s32.totalorder %s179, 0
      %s182 = sadd.s32 %s181, 1
      %s183 = scalar_select %p180, %s181, %s182
      %p186 = pneg %p180
      %p187 = scmp.eq.s32.totalorder %s20, 2
      %p188 = por %p186, %p187
      %p189 = scmp.ne.s32.totalorder %s181, %s184
      %p190 = scmp.eq.s32.totalorder %s20, 0
      %p191 = por %p189, %p190
      %p192 = scmp.ne.s32.totalorder %s181, %s184
      %p193 = scmp.eq.s32.totalorder %s25, 2
      %p194 = por %p192, %p193
      %p195 = scmp.ne.s32.totalorder %s184, %s185
      %p196 = scmp.eq.s32.totalorder %s25, 0
      %p197 = por %p195, %p196
      %p198 = scmp.ne.s32.totalorder %s184, %s185
      %p199 = scmp.eq.s32.totalorder %s26, 2
      %p200 = por %p198, %p199
      %p202 = scmp.ne.s32.totalorder %s185, %s201
      %p203 = scmp.eq.s32.totalorder %s26, 0
      %p204 = por %p202, %p203
      %s205 = ssub.s32 %s20, %s27
      %p206 = scmp.eq.s32.totalorder %s205, 0
      %s208 = sadd.s32 %s207, 1
      %s209 = scalar_select %p206, %s207, %s208
      %p212 = pneg %p206
      %p213 = scmp.eq.s32.totalorder %s20, 2
      %p214 = por %p212, %p213
      %p215 = scmp.ne.s32.totalorder %s207, %s210
      %p216 = scmp.eq.s32.totalorder %s20, 0
      %p217 = por %p215, %p216
      %p218 = scmp.ne.s32.totalorder %s207, %s210
      %p219 = scmp.eq.s32.totalorder %s25, 2
      %p220 = por %p218, %p219
      %p221 = scmp.ne.s32.totalorder %s210, %s211
      %p222 = scmp.eq.s32.totalorder %s25, 0
      %p223 = por %p221, %p222
      %p224 = scmp.ne.s32.totalorder %s210, %s211
      %p225 = scmp.eq.s32.totalorder %s26, 2
      %p226 = por %p224, %p225
      %p228 = scmp.ne.s32.totalorder %s211, %s227
      %p229 = scmp.eq.s32.totalorder %s26, 0
      %p230 = por %p228, %p229
      %p231 = scmp.le.s32.totalorder 1, %s20
      %p232 = scmp.lt.s32.totalorder %s20, 4
      %p233 = pnand %p231, %p232
      %p234 = pneg %p233
      // Predicated region
      $region9: #{_fused_lstm_forward.1} parent=5 // pred_check
        _
      $region10: #{_fused_lstm_forward.1} parent=5 // pred_check_branch
        %236 = sbr.rel (%p233) target = $region12
      $region11: #{_fused_lstm_forward.1} parent=5 // pred_region
        %s237 = ssub.s32 %s20, 1
        // Predicated region
        $region13: #{_fused_lstm_forward.1} parent=11 // pred_check
          %p238 = pneg %p41
        $region14: #{_fused_lstm_forward.1} parent=11 // pred_check_branch
          %240 = sbr.rel (%p238) target = $region16
        $region15: #{_fused_lstm_forward.1} parent=11 // pred_region
          _
        $region16: #{_fused_lstm_forward.1} parent=11 // pred_fallthru
          _
      $region12: #{_fused_lstm_forward.1} parent=5 // pred_fallthru
        _
      %p241 = scmp.lt.s32.totalorder %s20, 3
      // Predicated region
      $region17: #{_fused_lstm_forward.1} parent=5 // pred_check
        %p242 = pneg %p241
      $region18: #{_fused_lstm_forward.1} parent=5 // pred_check_branch
        %244 = sbr.rel (%p242) target = $region20
      $region19: #{_fused_lstm_forward.1} parent=5 // pred_region
        // Predicated region
        $region21: #{_fused_lstm_forward.1} parent=19 // pred_check
          %p245 = pneg %p61
        $region22: #{_fused_lstm_forward.1} parent=19 // pred_check_branch
          %247 = sbr.rel (%p245) target = $region24
        $region23: #{_fused_lstm_forward.1} parent=19 // pred_region
          %p248 = scmp.lt.s32.totalorder %s20, 2
          %s249 = scalar_select %p248, %s20, 2
          %s250 = smul.addr %s249, 8
          %s251 = scalar_lea.vmem %s1, %s250
        $region24: #{_fused_lstm_forward.1} parent=19 // pred_fallthru
          _
        // Predicated region
        $region25: #{_fused_lstm_forward.1} parent=19 // pred_check
          %p252 = pneg %p87
        $region26: #{_fused_lstm_forward.1} parent=19 // pred_check_branch
          %254 = sbr.rel (%p252) target = $region28
        $region27: #{_fused_lstm_forward.1} parent=19 // pred_region
          %p255 = scmp.lt.s32.totalorder %s20, 2
          %s256 = scalar_select %p255, %s20, 2
          %s257 = smul.addr %s256, 8
          %s258 = scalar_lea.vmem %s2, %s257
        $region28: #{_fused_lstm_forward.1} parent=19 // pred_fallthru
          _
        // Predicated region
        $region29: #{_fused_lstm_forward.1} parent=19 // pred_check
          %p259 = pneg %p113
        $region30: #{_fused_lstm_forward.1} parent=19 // pred_check_branch
          %261 = sbr.rel (%p259) target = $region32
        $region31: #{_fused_lstm_forward.1} parent=19 // pred_region
          %s262 = sand.u32 %s103, 1
          %s263 = scalar_lea.sflag [#allocation4], %s262
          %s264 = sand.u32 %s103, 1
          %s265 = smul.addr %s264, 256
          %s266 = scalar_lea.vmem [#allocation3], %s265
          %s268 = ssub.s32 4096, 4096
          %269 = vsyncadd %s263, %s268
          %s270 = smul.addr %s20, 64
          %s271 = smul.addr %s270, 64
          %s272 = scalar_lea.hbm %s3, %s271
          %s273 = sshll.u32 %s266, 4
          %s274 = int_to_ptr.vmem [resolvable:$true] %s273
          %279 = dma.hbm_to_vmem [thread:$0]  %s272, 4096, %s274, %s263, 256, 256, 16
        $region32: #{_fused_lstm_forward.1} parent=19 // pred_fallthru
          _
        // Predicated region
        $region33: #{_fused_lstm_forward.1} parent=19 // pred_check
          %p280 = pneg %p139
        $region34: #{_fused_lstm_forward.1} parent=19 // pred_check_branch
          %282 = sbr.rel (%p280) target = $region36
        $region35: #{_fused_lstm_forward.1} parent=19 // pred_region
          %s283 = sand.u32 %s129, 1
          %s284 = scalar_lea.sflag [#allocation6], %s283
          %s285 = sand.u32 %s129, 1
          %s286 = smul.addr %s285, 256
          %s287 = scalar_lea.vmem [#allocation5], %s286
          %s289 = ssub.s32 4096, 4096
          %290 = vsyncadd %s284, %s289
          %s291 = smul.addr %s20, 64
          %s292 = smul.addr %s291, 64
          %s293 = scalar_lea.hbm %s4, %s292
          %s294 = sshll.u32 %s287, 4
          %s295 = int_to_ptr.vmem [resolvable:$true] %s294
          %300 = dma.hbm_to_vmem [thread:$0]  %s293, 4096, %s295, %s284, 256, 256, 16
        $region36: #{_fused_lstm_forward.1} parent=19 // pred_fallthru
          _
        // Predicated region
        $region37: #{_fused_lstm_forward.1} parent=19 // pred_check
          %p301 = pneg %p165
        $region38: #{_fused_lstm_forward.1} parent=19 // pred_check_branch
          %303 = sbr.rel (%p301) target = $region40
        $region39: #{_fused_lstm_forward.1} parent=19 // pred_region
          %p304 = scmp.lt.s32.totalorder %s20, 2
          %s305 = scalar_select %p304, %s20, 2
          %s306 = smul.addr %s305, 4
          %s307 = scalar_lea.vmem %s5, %s306
        $region40: #{_fused_lstm_forward.1} parent=19 // pred_fallthru
          _
      $region20: #{_fused_lstm_forward.1} parent=5 // pred_fallthru
        _
      %p308 = scmp.le.s32.totalorder 1, %s20
      %p309 = scmp.lt.s32.totalorder %s20, 4
      %p310 = pnand %p308, %p309
      %p311 = pneg %p310
      // Predicated region
      $region41: #{_fused_lstm_forward.1} parent=5 // pred_check
        _
      $region42: #{_fused_lstm_forward.1} parent=5 // pred_check_branch
        %313 = sbr.rel (%p310) target = $region44
      $region43: #{_fused_lstm_forward.1} parent=5 // pred_region
        %s314 = ssub.s32 %s20, 1
        %s315 = sand.u32 %s106, 1
        %s316 = scalar_lea.sflag [#allocation4], %s315
        %s317 = sand.u32 %s106, 1
        %s318 = smul.addr %s317, 256
        %s319 = scalar_lea.vmem [#allocation3], %s318
        // Predicated region
        $region45: #{_fused_lstm_forward.1} parent=43 // pred_check
          %p320 = pneg %p119
        $region46: #{_fused_lstm_forward.1} parent=43 // pred_check_branch
          %322 = sbr.rel (%p320) target = $region48
        $region47: #{_fused_lstm_forward.1} parent=43 // pred_region
          %323 = dma.done %s316, 4096
        $region48: #{_fused_lstm_forward.1} parent=43 // pred_fallthru
          _
        %s324 = sand.u32 %s132, 1
        %s325 = scalar_lea.sflag [#allocation6], %s324
        %s326 = sand.u32 %s132, 1
        %s327 = smul.addr %s326, 256
        %s328 = scalar_lea.vmem [#allocation5], %s327
        // Predicated region
        $region49: #{_fused_lstm_forward.1} parent=43 // pred_check
          %p329 = pneg %p145
        $region50: #{_fused_lstm_forward.1} parent=43 // pred_check_branch
          %331 = sbr.rel (%p329) target = $region52
        $region51: #{_fused_lstm_forward.1} parent=43 // pred_region
          %332 = dma.done %s325, 4096
        $region52: #{_fused_lstm_forward.1} parent=43 // pred_fallthru
          _
        %p333 = pneg %p41
        %p334 = pneg %p38
        %p335 = scmp.lt.s32.totalorder %s25, 2
        %s336 = scalar_select %p335, %s25, 2
        %s337 = smul.addr %s336, 8
        %s338 = scalar_lea.vmem %s1, %s337
        %p339 = pneg %p67
        %p340 = pneg %p64
        %p341 = scmp.lt.s32.totalorder %s25, 2
        %s342 = scalar_select %p341, %s25, 2
        %s343 = smul.addr %s342, 8
        %s344 = scalar_lea.vmem %s2, %s343
        %p345 = pneg %p93
        %p346 = pneg %p90
        %s347 = sand.u32 %s106, 1
        %s348 = scalar_lea.sflag [#allocation4], %s347
        %s349 = sand.u32 %s106, 1
        %s350 = smul.addr %s349, 256
        %s351 = scalar_lea.vmem [#allocation3], %s350
        %p352 = pneg %p119
        %p353 = pneg %p116
        %s354 = sand.u32 %s132, 1
        %s355 = scalar_lea.sflag [#allocation6], %s354
        %s356 = sand.u32 %s132, 1
        %s357 = smul.addr %s356, 256
        %s358 = scalar_lea.vmem [#allocation5], %s357
        %p359 = pneg %p145
        %p360 = pneg %p142
        %p361 = scmp.lt.s32.totalorder %s25, 2
        %s362 = scalar_select %p361, %s25, 2
        %s363 = smul.addr %s362, 4
        %s364 = scalar_lea.vmem %s5, %s363
        %p365 = pneg %p171
        %p366 = pneg %p168
        %p367 = pneg %p197
        %p368 = pneg %p194
        %p369 = scmp.lt.s32.totalorder %s25, 2
        %s370 = scalar_select %p369, %s25, 2
        %s371 = smul.addr %s370, 8
        %s372 = scalar_lea.vmem %s6, %s371
        %p373 = pneg %p223
        %p374 = pneg %p220
        %p375 = scmp.lt.s32.totalorder %s25, 2
        %s376 = scalar_select %p375, %s25, 2
        %s377 = smul.addr %s376, 8
        %s378 = scalar_lea.vmem %s7, %s377
        %p379 = scmp.lt.s32.totalorder %s25, 2
        %s380 = scalar_select %p379, %s25, 2
        %s381 = smul.addr %s380, 8
        %s382 = scalar_lea.vmem %s1, %s381
        %p383 = scmp.lt.s32.totalorder %s25, 2
        %s384 = scalar_select %p383, %s25, 2
        %s385 = smul.addr %s384, 8
        %s386 = scalar_lea.vmem %s2, %s385
        %p387 = scmp.lt.s32.totalorder %s25, 2
        %s388 = scalar_select %p387, %s25, 2
        %s389 = smul.addr %s388, 4
        %s390 = scalar_lea.vmem %s5, %s389
        %p391 = scmp.lt.s32.totalorder %s25, 2
        %s392 = scalar_select %p391, %s25, 2
        %s393 = smul.addr %s392, 8
        %s394 = scalar_lea.vmem %s6, %s393
        %p395 = scmp.lt.s32.totalorder %s25, 2
        %s396 = scalar_select %p395, %s25, 2
        %s397 = smul.addr %s396, 8
        %s398 = scalar_lea.vmem %s7, %s397
        %p400 = scmp.eq.s32.totalorder %s25, 0
        // Predicated region
        $region53: #{_fused_lstm_forward.1} parent=43 // pred_check
          %p401 = pneg %p400
        $region54: #{_fused_lstm_forward.1} parent=43 // pred_check_branch
          %403 = sbr.rel (%p401) target = $region56
        $region55: #{_fused_lstm_forward.1} parent=43 // pred_region
          %v404 = vld [vmem:[%s0] sm:$0xff]
          %405 = vst [vmem:[#allocation2] sm:$0xff] %v404
        $region56: #{_fused_lstm_forward.1} parent=43 // pred_fallthru
          _
        %v406 = vld [vmem:[%s382] sm:$0xff]
        %v407 = vld [vmem:[%s386] sm:$0xff]
        %v408 = vld [vmem:[#allocation2] sm:$0xff]
        %v409 = vpack.c.bf16 %v408, %v408
        %v410 = vld [vmem:[%s319] sm:$0xff]
        %v411 = vld [vmem:[%s319 + $0x8] sm:$0xff]
        %v412 = vld [vmem:[%s319 + $0x10] sm:$0xff]
        %v413 = vld [vmem:[%s319 + $0x18] sm:$0xff]
        %v414 = vld [vmem:[%s319 + $0x20] sm:$0xff]
        %v415 = vld [vmem:[%s319 + $0x28] sm:$0xff]
        %v416 = vld [vmem:[%s319 + $0x30] sm:$0xff]
        %v417 = vld [vmem:[%s319 + $0x38] sm:$0xff]
        %v418 = vld [vmem:[%s319 + $0x40] sm:$0xff]
        %v419 = vld [vmem:[%s319 + $0x48] sm:$0xff]
        %v420 = vld [vmem:[%s319 + $0x50] sm:$0xff]
        %v421 = vld [vmem:[%s319 + $0x58] sm:$0xff]
        %v422 = vld [vmem:[%s319 + $0x60] sm:$0xff]
        %v423 = vld [vmem:[%s319 + $0x68] sm:$0xff]
        %v424 = vld [vmem:[%s319 + $0x70] sm:$0xff]
        %v425 = vld [vmem:[%s319 + $0x78] sm:$0xff]
        %v426 = vld [vmem:[%s319 + $0x80] sm:$0xff]
        %v427 = vld [vmem:[%s319 + $0x88] sm:$0xff]
        %v428 = vld [vmem:[%s319 + $0x90] sm:$0xff]
        %v429 = vld [vmem:[%s319 + $0x98] sm:$0xff]
        %v430 = vld [vmem:[%s319 + $0xa0] sm:$0xff]
        %v431 = vld [vmem:[%s319 + $0xa8] sm:$0xff]
        %v432 = vld [vmem:[%s319 + $0xb0] sm:$0xff]
        %v433 = vld [vmem:[%s319 + $0xb8] sm:$0xff]
        %v434 = vld [vmem:[%s319 + $0xc0] sm:$0xff]
        %v435 = vld [vmem:[%s319 + $0xc8] sm:$0xff]
        %v436 = vld [vmem:[%s319 + $0xd0] sm:$0xff]
        %v437 = vld [vmem:[%s319 + $0xd8] sm:$0xff]
        %v438 = vld [vmem:[%s319 + $0xe0] sm:$0xff]
        %v439 = vld [vmem:[%s319 + $0xe8] sm:$0xff]
        %v440 = vld [vmem:[%s319 + $0xf0] sm:$0xff]
        %v441 = vld [vmem:[%s319 + $0xf8] sm:$0xff]
        %v442 = vpack.c.bf16 %v406, %v406
        %v443 = vld [vmem:[%s328] sm:$0xff]
        %v444 = vld [vmem:[%s328 + $0x8] sm:$0xff]
        %v445 = vld [vmem:[%s328 + $0x10] sm:$0xff]
        %v446 = vld [vmem:[%s328 + $0x18] sm:$0xff]
        %v447 = vld [vmem:[%s328 + $0x20] sm:$0xff]
        %v448 = vld [vmem:[%s328 + $0x28] sm:$0xff]
        %v449 = vld [vmem:[%s328 + $0x30] sm:$0xff]
        %v450 = vld [vmem:[%s328 + $0x38] sm:$0xff]
        %v451 = vld [vmem:[%s328 + $0x40] sm:$0xff]
        %v452 = vld [vmem:[%s328 + $0x48] sm:$0xff]
        %v453 = vld [vmem:[%s328 + $0x50] sm:$0xff]
        %v454 = vld [vmem:[%s328 + $0x58] sm:$0xff]
        %v455 = vld [vmem:[%s328 + $0x60] sm:$0xff]
        %v456 = vld [vmem:[%s328 + $0x68] sm:$0xff]
        %v457 = vld [vmem:[%s328 + $0x70] sm:$0xff]
        %v458 = vld [vmem:[%s328 + $0x78] sm:$0xff]
        %v459 = vld [vmem:[%s328 + $0x80] sm:$0xff]
        %v460 = vld [vmem:[%s328 + $0x88] sm:$0xff]
        %v461 = vld [vmem:[%s328 + $0x90] sm:$0xff]
        %v462 = vld [vmem:[%s328 + $0x98] sm:$0xff]
        %v463 = vld [vmem:[%s328 + $0xa0] sm:$0xff]
        %v464 = vld [vmem:[%s328 + $0xa8] sm:$0xff]
        %v465 = vld [vmem:[%s328 + $0xb0] sm:$0xff]
        %v466 = vld [vmem:[%s328 + $0xb8] sm:$0xff]
        %v467 = vld [vmem:[%s328 + $0xc0] sm:$0xff]
        %v468 = vld [vmem:[%s328 + $0xc8] sm:$0xff]
        %v469 = vld [vmem:[%s328 + $0xd0] sm:$0xff]
        %v470 = vld [vmem:[%s328 + $0xd8] sm:$0xff]
        %v471 = vld [vmem:[%s328 + $0xe0] sm:$0xff]
        %v472 = vld [vmem:[%s328 + $0xe8] sm:$0xff]
        %v473 = vld [vmem:[%s328 + $0xf0] sm:$0xff]
        %v474 = vld [vmem:[%s328 + $0xf8] sm:$0xff]
        %v507 = vunpack.c.l.b16 %v443
        %v508 = vunpack.c.h.b16 %v443
        %v509 = vunpack.c.l.b16 %v444
        %v510 = vunpack.c.h.b16 %v444
        %v511 = vunpack.c.l.b16 %v445
        %v512 = vunpack.c.h.b16 %v445
        %v513 = vunpack.c.l.b16 %v446
        %v514 = vunpack.c.h.b16 %v446
        %v515 = vunpack.c.l.b16 %v447
        %v516 = vunpack.c.h.b16 %v447
        %v517 = vunpack.c.l.b16 %v448
        %v518 = vunpack.c.h.b16 %v448
        %v519 = vunpack.c.l.b16 %v449
        %v520 = vunpack.c.h.b16 %v449
        %v521 = vunpack.c.l.b16 %v450
        %v522 = vunpack.c.h.b16 %v450
        %v523 = vunpack.c.l.b16 %v451
        %v524 = vunpack.c.h.b16 %v451
        %v525 = vunpack.c.l.b16 %v452
        %v526 = vunpack.c.h.b16 %v452
        %v527 = vunpack.c.l.b16 %v453
        %v528 = vunpack.c.h.b16 %v453
        %v529 = vunpack.c.l.b16 %v454
        %v530 = vunpack.c.h.b16 %v454
        %v531 = vunpack.c.l.b16 %v455
        %v532 = vunpack.c.h.b16 %v455
        %v533 = vunpack.c.l.b16 %v456
        %v534 = vunpack.c.h.b16 %v456
        %v535 = vunpack.c.l.b16 %v457
        %v536 = vunpack.c.h.b16 %v457
        %v537 = vunpack.c.l.b16 %v458
        %v538 = vunpack.c.h.b16 %v458
        %v539 = vunpack.c.l.b16 %v459
        %v540 = vunpack.c.h.b16 %v459
        %v541 = vunpack.c.l.b16 %v460
        %v542 = vunpack.c.h.b16 %v460
        %v543 = vunpack.c.l.b16 %v461
        %v544 = vunpack.c.h.b16 %v461
        %v545 = vunpack.c.l.b16 %v462
        %v546 = vunpack.c.h.b16 %v462
        %v547 = vunpack.c.l.b16 %v463
        %v548 = vunpack.c.h.b16 %v463
        %v549 = vunpack.c.l.b16 %v464
        %v550 = vunpack.c.h.b16 %v464
        %v551 = vunpack.c.l.b16 %v465
        %v552 = vunpack.c.h.b16 %v465
        %v553 = vunpack.c.l.b16 %v466
        %v554 = vunpack.c.h.b16 %v466
        %v555 = vunpack.c.l.b16 %v467
        %v556 = vunpack.c.h.b16 %v467
        %v557 = vunpack.c.l.b16 %v468
        %v558 = vunpack.c.h.b16 %v468
        %v559 = vunpack.c.l.b16 %v469
        %v560 = vunpack.c.h.b16 %v469
        %v561 = vunpack.c.l.b16 %v470
        %v562 = vunpack.c.h.b16 %v470
        %v563 = vunpack.c.l.b16 %v471
        %v564 = vunpack.c.h.b16 %v471
        %v565 = vunpack.c.l.b16 %v472
        %v566 = vunpack.c.h.b16 %v472
        %v567 = vunpack.c.l.b16 %v473
        %v568 = vunpack.c.h.b16 %v473
        %v569 = vunpack.c.l.b16 %v474
        %v570 = vunpack.c.h.b16 %v474
        %v571 = vpack.c.b16 %v511, %v507
        %v572 = vpack.c.b16 %v512, %v508
        %v573 = vpack.c.b16 %v513, %v509
        %v574 = vpack.c.b16 %v514, %v510
        %v575 = vpack.c.b16 %v519, %v515
        %v576 = vpack.c.b16 %v520, %v516
        %v577 = vpack.c.b16 %v521, %v517
        %v578 = vpack.c.b16 %v522, %v518
        %v579 = vpack.c.b16 %v527, %v523
        %v580 = vpack.c.b16 %v528, %v524
        %v581 = vpack.c.b16 %v529, %v525
        %v582 = vpack.c.b16 %v530, %v526
        %v583 = vpack.c.b16 %v535, %v531
        %v584 = vpack.c.b16 %v536, %v532
        %v585 = vpack.c.b16 %v537, %v533
        %v586 = vpack.c.b16 %v538, %v534
        %v587 = vpack.c.b16 %v543, %v539
        %v588 = vpack.c.b16 %v544, %v540
        %v589 = vpack.c.b16 %v545, %v541
        %v590 = vpack.c.b16 %v546, %v542
        %v591 = vpack.c.b16 %v551, %v547
        %v592 = vpack.c.b16 %v552, %v548
        %v593 = vpack.c.b16 %v553, %v549
        %v594 = vpack.c.b16 %v554, %v550
        %v595 = vpack.c.b16 %v559, %v555
        %v596 = vpack.c.b16 %v560, %v556
        %v597 = vpack.c.b16 %v561, %v557
        %v598 = vpack.c.b16 %v562, %v558
        %v599 = vpack.c.b16 %v567, %v563
        %v600 = vpack.c.b16 %v568, %v564
        %v601 = vpack.c.b16 %v569, %v565
        %v602 = vpack.c.b16 %v570, %v566
        %635 = vmatprep.subr.bf16.mxu0 %v572
        %636 = vmatpush1.bf16.msra.mxu0 %v571
        %637 = vmatprep.subr.bf16.mxu0 %v576
        %638 = vmatpush1.bf16.msra.mxu0 %v575
        %639 = vmatprep.subr.bf16.mxu0 %v580
        %640 = vmatpush1.bf16.msra.mxu0 %v579
        %641 = vmatprep.subr.bf16.mxu0 %v584
        %642 = vmatpush1.bf16.msra.mxu0 %v583
        %643 = vmatprep.subr.bf16.mxu0 %v588
        %644 = vmatpush1.bf16.msra.mxu0 %v587
        %645 = vmatprep.subr.bf16.mxu0 %v592
        %646 = vmatpush1.bf16.msra.mxu0 %v591
        %647 = vmatprep.subr.bf16.mxu0 %v596
        %648 = vmatpush1.bf16.msra.mxu0 %v595
        %649 = vmatprep.subr.bf16.mxu0 %v600
        %650 = vmatpush1.bf16.msra.mxu0 %v599
        %651 = vmatprep.subr.bf16.mxu0 0
        %652 = vmatpush1.bf16.msra.mxu0 0
        %653 = vmatprep.subr.bf16.mxu0 0
        %654 = vmatpush1.bf16.msra.mxu0 0
        %655 = vmatprep.subr.bf16.mxu0 0
        %656 = vmatpush1.bf16.msra.mxu0 0
        %657 = vmatprep.subr.bf16.mxu0 0
        %658 = vmatpush1.bf16.msra.mxu0 0
        %659 = vmatprep.subr.bf16.mxu0 0
        %660 = vmatpush1.bf16.msra.mxu0 0
        %661 = vmatprep.subr.bf16.mxu0 0
        %662 = vmatpush1.bf16.msra.mxu0 0
        %663 = vmatprep.subr.bf16.mxu0 0
        %664 = vmatpush1.bf16.msra.mxu0 0
        %665 = vmatprep.subr.bf16.mxu0 0
        %666 = vmatpush1.bf16.msra.mxu0 0
        %667 = vmatprep.mubr.bf16.mxu0 0
        %668 = vmatmul.mubr.bf16.gmra.mrb[0].mxu0 %v442
        %v669 = vpop.f32.mrb[0].mxu0
        %v670 = vadd.f32 0.0, %v669
        %v671 = vpop.f32.mrb[0].mxu0
        %v672 = vadd.f32 0.0, %v671
        %v673 = vpop.f32.mrb[0].mxu0
        %v674 = vpop.f32.mrb[0].mxu0
        %675 = vdwg.mxu0
        %676 = vmatprep.subr.bf16.mxu0 %v574
        %677 = vmatpush1.bf16.msra.mxu0 %v573
        %678 = vmatprep.subr.bf16.mxu0 %v578
        %679 = vmatpush1.bf16.msra.mxu0 %v577
        %680 = vmatprep.subr.bf16.mxu0 %v582
        %681 = vmatpush1.bf16.msra.mxu0 %v581
        %682 = vmatprep.subr.bf16.mxu0 %v586
        %683 = vmatpush1.bf16.msra.mxu0 %v585
        %684 = vmatprep.subr.bf16.mxu0 %v590
        %685 = vmatpush1.bf16.msra.mxu0 %v589
        %686 = vmatprep.subr.bf16.mxu0 %v594
        %687 = vmatpush1.bf16.msra.mxu0 %v593
        %688 = vmatprep.subr.bf16.mxu0 %v598
        %689 = vmatpush1.bf16.msra.mxu0 %v597
        %690 = vmatprep.subr.bf16.mxu0 %v602
        %691 = vmatpush1.bf16.msra.mxu0 %v601
        %692 = vmatprep.subr.bf16.mxu0 0
        %693 = vmatpush1.bf16.msra.mxu0 0
        %694 = vmatprep.subr.bf16.mxu0 0
        %695 = vmatpush1.bf16.msra.mxu0 0
        %696 = vmatprep.subr.bf16.mxu0 0
        %697 = vmatpush1.bf16.msra.mxu0 0
        %698 = vmatprep.subr.bf16.mxu0 0
        %699 = vmatpush1.bf16.msra.mxu0 0
        %700 = vmatprep.subr.bf16.mxu0 0
        %701 = vmatpush1.bf16.msra.mxu0 0
        %702 = vmatprep.subr.bf16.mxu0 0
        %703 = vmatpush1.bf16.msra.mxu0 0
        %704 = vmatprep.subr.bf16.mxu0 0
        %705 = vmatpush1.bf16.msra.mxu0 0
        %706 = vmatprep.subr.bf16.mxu0 0
        %707 = vmatpush1.bf16.msra.mxu0 0
        %708 = vmatprep.mubr.bf16.mxu0 0
        %709 = vmatmul.mubr.bf16.gmra.mrb[0].mxu0 %v442
        %v710 = vpop.f32.mrb[0].mxu0
        %v711 = vadd.f32 0.0, %v710
        %v712 = vpop.f32.mrb[0].mxu0
        %v713 = vadd.f32 0.0, %v712
        %v714 = vpop.f32.mrb[0].mxu0
        %v715 = vpop.f32.mrb[0].mxu0
        %716 = vdwg.mxu0
        %v749 = vunpack.c.l.b16 %v410
        %v750 = vunpack.c.h.b16 %v410
        %v751 = vunpack.c.l.b16 %v411
        %v752 = vunpack.c.h.b16 %v411
        %v753 = vunpack.c.l.b16 %v412
        %v754 = vunpack.c.h.b16 %v412
        %v755 = vunpack.c.l.b16 %v413
        %v756 = vunpack.c.h.b16 %v413
        %v757 = vunpack.c.l.b16 %v414
        %v758 = vunpack.c.h.b16 %v414
        %v759 = vunpack.c.l.b16 %v415
        %v760 = vunpack.c.h.b16 %v415
        %v761 = vunpack.c.l.b16 %v416
        %v762 = vunpack.c.h.b16 %v416
        %v763 = vunpack.c.l.b16 %v417
        %v764 = vunpack.c.h.b16 %v417
        %v765 = vunpack.c.l.b16 %v418
        %v766 = vunpack.c.h.b16 %v418
        %v767 = vunpack.c.l.b16 %v419
        %v768 = vunpack.c.h.b16 %v419
        %v769 = vunpack.c.l.b16 %v420
        %v770 = vunpack.c.h.b16 %v420
        %v771 = vunpack.c.l.b16 %v421
        %v772 = vunpack.c.h.b16 %v421
        %v773 = vunpack.c.l.b16 %v422
        %v774 = vunpack.c.h.b16 %v422
        %v775 = vunpack.c.l.b16 %v423
        %v776 = vunpack.c.h.b16 %v423
        %v777 = vunpack.c.l.b16 %v424
        %v778 = vunpack.c.h.b16 %v424
        %v779 = vunpack.c.l.b16 %v425
        %v780 = vunpack.c.h.b16 %v425
        %v781 = vunpack.c.l.b16 %v426
        %v782 = vunpack.c.h.b16 %v426
        %v783 = vunpack.c.l.b16 %v427
        %v784 = vunpack.c.h.b16 %v427
        %v785 = vunpack.c.l.b16 %v428
        %v786 = vunpack.c.h.b16 %v428
        %v787 = vunpack.c.l.b16 %v429
        %v788 = vunpack.c.h.b16 %v429
        %v789 = vunpack.c.l.b16 %v430
        %v790 = vunpack.c.h.b16 %v430
        %v791 = vunpack.c.l.b16 %v431
        %v792 = vunpack.c.h.b16 %v431
        %v793 = vunpack.c.l.b16 %v432
        %v794 = vunpack.c.h.b16 %v432
        %v795 = vunpack.c.l.b16 %v433
        %v796 = vunpack.c.h.b16 %v433
        %v797 = vunpack.c.l.b16 %v434
        %v798 = vunpack.c.h.b16 %v434
        %v799 = vunpack.c.l.b16 %v435
        %v800 = vunpack.c.h.b16 %v435
        %v801 = vunpack.c.l.b16 %v436
        %v802 = vunpack.c.h.b16 %v436
        %v803 = vunpack.c.l.b16 %v437
        %v804 = vunpack.c.h.b16 %v437
        %v805 = vunpack.c.l.b16 %v438
        %v806 = vunpack.c.h.b16 %v438
        %v807 = vunpack.c.l.b16 %v439
        %v808 = vunpack.c.h.b16 %v439
        %v809 = vunpack.c.l.b16 %v440
        %v810 = vunpack.c.h.b16 %v440
        %v811 = vunpack.c.l.b16 %v441
        %v812 = vunpack.c.h.b16 %v441
        %v813 = vpack.c.b16 %v753, %v749
        %v814 = vpack.c.b16 %v754, %v750
        %v815 = vpack.c.b16 %v755, %v751
        %v816 = vpack.c.b16 %v756, %v752
        %v817 = vpack.c.b16 %v761, %v757
        %v818 = vpack.c.b16 %v762, %v758
        %v819 = vpack.c.b16 %v763, %v759
        %v820 = vpack.c.b16 %v764, %v760
        %v821 = vpack.c.b16 %v769, %v765
        %v822 = vpack.c.b16 %v770, %v766
        %v823 = vpack.c.b16 %v771, %v767
        %v824 = vpack.c.b16 %v772, %v768
        %v825 = vpack.c.b16 %v777, %v773
        %v826 = vpack.c.b16 %v778, %v774
        %v827 = vpack.c.b16 %v779, %v775
        %v828 = vpack.c.b16 %v780, %v776
        %v829 = vpack.c.b16 %v785, %v781
        %v830 = vpack.c.b16 %v786, %v782
        %v831 = vpack.c.b16 %v787, %v783
        %v832 = vpack.c.b16 %v788, %v784
        %v833 = vpack.c.b16 %v793, %v789
        %v834 = vpack.c.b16 %v794, %v790
        %v835 = vpack.c.b16 %v795, %v791
        %v836 = vpack.c.b16 %v796, %v792
        %v837 = vpack.c.b16 %v801, %v797
        %v838 = vpack.c.b16 %v802, %v798
        %v839 = vpack.c.b16 %v803, %v799
        %v840 = vpack.c.b16 %v804, %v800
        %v841 = vpack.c.b16 %v809, %v805
        %v842 = vpack.c.b16 %v810, %v806
        %v843 = vpack.c.b16 %v811, %v807
        %v844 = vpack.c.b16 %v812, %v808
        %877 = vmatprep.subr.bf16.mxu0 %v814
        %878 = vmatpush1.bf16.msra.mxu0 %v813
        %879 = vmatprep.subr.bf16.mxu0 %v818
        %880 = vmatpush1.bf16.msra.mxu0 %v817
        %881 = vmatprep.subr.bf16.mxu0 %v822
        %882 = vmatpush1.bf16.msra.mxu0 %v821
        %883 = vmatprep.subr.bf16.mxu0 %v826
        %884 = vmatpush1.bf16.msra.mxu0 %v825
        %885 = vmatprep.subr.bf16.mxu0 %v830
        %886 = vmatpush1.bf16.msra.mxu0 %v829
        %887 = vmatprep.subr.bf16.mxu0 %v834
        %888 = vmatpush1.bf16.msra.mxu0 %v833
        %889 = vmatprep.subr.bf16.mxu0 %v838
        %890 = vmatpush1.bf16.msra.mxu0 %v837
        %891 = vmatprep.subr.bf16.mxu0 %v842
        %892 = vmatpush1.bf16.msra.mxu0 %v841
        %893 = vmatprep.subr.bf16.mxu0 0
        %894 = vmatpush1.bf16.msra.mxu0 0
        %895 = vmatprep.subr.bf16.mxu0 0
        %896 = vmatpush1.bf16.msra.mxu0 0
        %897 = vmatprep.subr.bf16.mxu0 0
        %898 = vmatpush1.bf16.msra.mxu0 0
        %899 = vmatprep.subr.bf16.mxu0 0
        %900 = vmatpush1.bf16.msra.mxu0 0
        %901 = vmatprep.subr.bf16.mxu0 0
        %902 = vmatpush1.bf16.msra.mxu0 0
        %903 = vmatprep.subr.bf16.mxu0 0
        %904 = vmatpush1.bf16.msra.mxu0 0
        %905 = vmatprep.subr.bf16.mxu0 0
        %906 = vmatpush1.bf16.msra.mxu0 0
        %907 = vmatprep.subr.bf16.mxu0 0
        %908 = vmatpush1.bf16.msra.mxu0 0
        %909 = vmatprep.mubr.bf16.mxu0 0
        %910 = vmatmul.mubr.bf16.gmra.mrb[0].mxu0 %v409
        %v911 = vpop.f32.mrb[0].mxu0
        %v912 = vadd.f32 %v670, %v911
        %v913 = vpop.f32.mrb[0].mxu0
        %v914 = vadd.f32 %v672, %v913
        %v915 = vpop.f32.mrb[0].mxu0
        %v916 = vpop.f32.mrb[0].mxu0
        %917 = vdwg.mxu0
        %918 = vmatprep.subr.bf16.mxu0 %v816
        %919 = vmatpush1.bf16.msra.mxu0 %v815
        %920 = vmatprep.subr.bf16.mxu0 %v820
        %921 = vmatpush1.bf16.msra.mxu0 %v819
        %922 = vmatprep.subr.bf16.mxu0 %v824
        %923 = vmatpush1.bf16.msra.mxu0 %v823
        %924 = vmatprep.subr.bf16.mxu0 %v828
        %925 = vmatpush1.bf16.msra.mxu0 %v827
        %926 = vmatprep.subr.bf16.mxu0 %v832
        %927 = vmatpush1.bf16.msra.mxu0 %v831
        %928 = vmatprep.subr.bf16.mxu0 %v836
        %929 = vmatpush1.bf16.msra.mxu0 %v835
        %930 = vmatprep.subr.bf16.mxu0 %v840
        %931 = vmatpush1.bf16.msra.mxu0 %v839
        %932 = vmatprep.subr.bf16.mxu0 %v844
        %933 = vmatpush1.bf16.msra.mxu0 %v843
        %934 = vmatprep.subr.bf16.mxu0 0
        %935 = vmatpush1.bf16.msra.mxu0 0
        %936 = vmatprep.subr.bf16.mxu0 0
        %937 = vmatpush1.bf16.msra.mxu0 0
        %938 = vmatprep.subr.bf16.mxu0 0
        %939 = vmatpush1.bf16.msra.mxu0 0
        %940 = vmatprep.subr.bf16.mxu0 0
        %941 = vmatpush1.bf16.msra.mxu0 0
        %942 = vmatprep.subr.bf16.mxu0 0
        %943 = vmatpush1.bf16.msra.mxu0 0
        %944 = vmatprep.subr.bf16.mxu0 0
        %945 = vmatpush1.bf16.msra.mxu0 0
        %946 = vmatprep.subr.bf16.mxu0 0
        %947 = vmatpush1.bf16.msra.mxu0 0
        %948 = vmatprep.subr.bf16.mxu0 0
        %949 = vmatpush1.bf16.msra.mxu0 0
        %950 = vmatprep.mubr.bf16.mxu0 0
        %951 = vmatmul.mubr.bf16.gmra.mrb[0].mxu0 %v409
        %v952 = vpop.f32.mrb[0].mxu0
        %v953 = vadd.f32 %v711, %v952
        %v954 = vpop.f32.mrb[0].mxu0
        %v955 = vadd.f32 %v713, %v954
        %v956 = vpop.f32.mrb[0].mxu0
        %v957 = vpop.f32.mrb[0].mxu0
        %958 = vdwg.mxu0
        %v959 = vld [vmem:[%s390] sm:$0xf]
        %v961 = vlaneseq
        %v962 = vshrl.u32 %v961, 7
        %v963 = vsub.s32 0, %v962
        %v964 = vrot.slane %v959, %v963
        %v965 = vlaneseq
        %v966 = vshrl.u32 %v965, 7
        %v967 = vsub.s32 1, %v966
        %v968 = vrot.slane %v959, %v967
        %v969 = vlaneseq
        %v970 = vshrl.u32 %v969, 7
        %v971 = vsub.s32 2, %v970
        %v972 = vrot.slane %v959, %v971
        %v973 = vlaneseq
        %v974 = vshrl.u32 %v973, 7
        %v975 = vsub.s32 3, %v974
        %v976 = vrot.slane %v959, %v975
        %v981 = vadd.f32 %v912, %v964
        %v982 = vadd.f32 %v914, %v968
        %v983 = vadd.f32 %v953, %v972
        %v984 = vadd.f32 %v955, %v976
        %v985 = vxor.u32 %v981, 2147483648
        %v986 = vxor.u32 %v982, 2147483648
        %v987 = vxor.u32 %v983, 2147483648
        %v988 = vmul.f32 %v985, 1.442695
        %v989 = vpow.pop %v988
        %v990 = vmul.f32 %v986, 1.442695
        %v991 = vpow.pop %v990
        %v992 = vmul.f32 %v987, 1.442695
        %v993 = vpow.pop %v992
        %v994 = vadd.f32 %v989, 1.0
        %v995 = vadd.f32 %v991, 1.0
        %v996 = vadd.f32 %v993, 1.0
        %v997 = vrcp.pop %v994
        %v998 = vmul.f32 1.0, %v997
        %v999 = vrcp.pop %v995
        %v1000 = vmul.f32 1.0, %v999
        %v1001 = vrcp.pop %v996
        %v1002 = vmul.f32 1.0, %v1001
        %v1003 = vtanh.pop %v984
        %v1004 = vmul.f32 %v1000, %v407
        %v1005 = vmul.f32 %v998, %v1003
        %v1006 = vadd.f32 %v1004, %v1005
        %v1007 = vtanh.pop %v1006
        %v1008 = vmul.f32 %v1002, %v1007
        %1009 = vst [vmem:[%s394] sm:$0xff] %v1008
        %1010 = vst [vmem:[%s398] sm:$0xff] %v1006
        %1011 = vst [vmem:[#allocation2] sm:$0xff] %v1008
        %p1012 = scmp.lt.s32.totalorder %s25, 2
        %s1013 = scalar_select %p1012, %s25, 2
        %s1014 = smul.addr %s1013, 8
        %s1015 = scalar_lea.vmem %s6, %s1014
        %p1016 = scmp.lt.s32.totalorder %s25, 2
        %s1017 = scalar_select %p1016, %s25, 2
        %s1018 = smul.addr %s1017, 8
        %s1019 = scalar_lea.vmem %s7, %s1018
        // Predicated region
        $region57: #{_fused_lstm_forward.1} parent=43 // pred_check
          %p1020 = pneg %p194
        $region58: #{_fused_lstm_forward.1} parent=43 // pred_check_branch
          %1022 = sbr.rel (%p1020) target = $region60
        $region59: #{_fused_lstm_forward.1} parent=43 // pred_region
          _
        $region60: #{_fused_lstm_forward.1} parent=43 // pred_fallthru
          _
        // Predicated region
        $region61: #{_fused_lstm_forward.1} parent=43 // pred_check
          %p1023 = pneg %p220
        $region62: #{_fused_lstm_forward.1} parent=43 // pred_check_branch
          %1025 = sbr.rel (%p1023) target = $region64
        $region63: #{_fused_lstm_forward.1} parent=43 // pred_region
          _
        $region64: #{_fused_lstm_forward.1} parent=43 // pred_fallthru
          _
      $region44: #{_fused_lstm_forward.1} parent=5 // pred_fallthru
        _
      %p1026 = scmp.le.s32.totalorder 2, %s20
      // Predicated region
      $region65: #{_fused_lstm_forward.1} parent=5 // pred_check
        %p1027 = pneg %p1026
      $region66: #{_fused_lstm_forward.1} parent=5 // pred_check_branch
        %1029 = sbr.rel (%p1027) target = $region68
      $region67: #{_fused_lstm_forward.1} parent=5 // pred_region
        %s1030 = ssub.s32 %s20, 2
        // Predicated region
        $region69: #{_fused_lstm_forward.1} parent=67 // pred_check
          %p1031 = pneg %p200
        $region70: #{_fused_lstm_forward.1} parent=67 // pred_check_branch
          %1033 = sbr.rel (%p1031) target = $region72
        $region71: #{_fused_lstm_forward.1} parent=67 // pred_region
          %p1034 = scmp.lt.s32.totalorder %s26, 2
          %s1035 = scalar_select %p1034, %s26, 2
          %s1036 = smul.addr %s1035, 8
          %s1037 = scalar_lea.vmem %s6, %s1036
        $region72: #{_fused_lstm_forward.1} parent=67 // pred_fallthru
          _
        // Predicated region
        $region73: #{_fused_lstm_forward.1} parent=67 // pred_check
          %p1038 = pneg %p226
        $region74: #{_fused_lstm_forward.1} parent=67 // pred_check_branch
          %1040 = sbr.rel (%p1038) target = $region76
        $region75: #{_fused_lstm_forward.1} parent=67 // pred_region
          %p1041 = scmp.lt.s32.totalorder %s26, 2
          %s1042 = scalar_select %p1041, %s26, 2
          %s1043 = smul.addr %s1042, 8
          %s1044 = scalar_lea.vmem %s7, %s1043
        $region76: #{_fused_lstm_forward.1} parent=67 // pred_fallthru
          _
      $region68: #{_fused_lstm_forward.1} parent=5 // pred_fallthru
        _
    $region6: #{_fused_lstm_forward.1} parent=1 // loop_footer
      %s24 = sadd.s32 1, %s20
    $region7: #{_fused_lstm_forward.1} parent=1 // loop_footer_branch
      %19 = sbr.rel target = $region3
    $region8: #{_fused_lstm_forward.1} parent=1 // loop_exit
      _
    %1045 = vsyncpa [#allocation4], 1
    %s1046 = scalar_lea.sflag [#allocation4], 1
    %1047 = vsyncpa %s1046, 1
    %1048 = vsyncpa [#allocation6], 1
    %s1049 = scalar_lea.sflag [#allocation6], 1
    %1050 = vsyncpa %s1049, 1

</llo_original>
